<compile_context>
chip_gen: v5e
topology: v5e:2x2
jax: 0.10.0
libtpu: 0.0.40
codegen_flags: <defaults>
</compile_context>

<pallas_src>
import math

import jax
import jax.numpy as jnp
from jax.experimental import pallas as pl
from jax.experimental.pallas import tpu as pltpu

# -------------------- model configuration (synthetic, deterministic) --------------------
# obs_space.shape = (h=1, w=16, in_channels=4); conv_filters as (out_channels, kernel, stride)
OBS_SHAPE = (1, 16, 4)
FILTERS = [(8, 4, 2), (16, 4, 2), (16, 4, 1)]   # last conv reduces spatial dim to 1
NUM_OUTPUTS = 6
BATCH = 2


def same_padding_1d(in_size, filter_size, stride_size):
    out_width = int(math.ceil(float(in_size) / float(stride_size)))
    pad_along = int((out_width - 1) * stride_size + filter_size - in_size)
    pad_along = max(pad_along, 0)
    pad_left = pad_along // 2
    pad_right = pad_along - pad_left
    return (pad_left, pad_right), out_width


# -------------------- static layer geometry (all Python ints, baked into the kernel) ----
L_IN0 = OBS_SHAPE[1]                                     # 16
C_IN0 = OBS_SHAPE[2]                                     # 4

C0_OUT, K0, S0 = FILTERS[0]                              # 8, 4, 2
(P0L, P0R), L0_OUT = same_padding_1d(L_IN0, K0, S0)      # (1,1), 8

C1_OUT, K1, S1 = FILTERS[1]                              # 16, 4, 2
(P1L, P1R), L1_OUT = same_padding_1d(L0_OUT, K1, S1)     # (1,1), 4

C2_OUT, K2, S2 = FILTERS[2]                              # 16, 4, 1
L2_OUT = (L1_OUT - K2) // S2 + 1                         # 1  (VALID conv on the last layer)
assert L2_OUT == 1, "conv_filters do not reduce the spatial dim to 1"

# Flattened (length-major, channel-minor) activation widths per layer.
D_IN0 = L_IN0 * C_IN0        # 64   conv0 input
D_IN1 = L0_OUT * C0_OUT      # 64   conv1 input
D_IN2 = L1_OUT * C1_OUT      # 64   conv2 input
D_FEAT = L2_OUT * C2_OUT     # 16   conv2 output / logits input

WIDTH = 64                   # lane width of the packed slab and of every matmul operand
assert D_IN0 == WIDTH and D_IN1 <= WIDTH and D_IN2 <= WIDTH
assert D_FEAT <= WIDTH and NUM_OUTPUTS <= WIDTH

# Static row offsets inside the packed parameter slab [SLAB_ROWS, WIDTH].
ROW_W0 = 0
ROW_W1 = ROW_W0 + WIDTH      # 64
ROW_W2 = ROW_W1 + WIDTH      # 128
ROW_WL = ROW_W2 + WIDTH      # 192
ROW_B0 = ROW_WL + WIDTH      # 256
ROW_B1 = ROW_B0 + 1          # 257
ROW_B2 = ROW_B1 + 1          # 258
ROW_BL = ROW_B2 + 1          # 259
SLAB_ROWS = ROW_BL + 1       # 260


# -------------------- fused Pallas kernel: 4 matmuls + 3 ReLUs --------------------
def _fused_forward_kernel(x_ref, p_ref, out_ref):
    # Static slices into the single packed parameter slab (one DMA for all params).
    w0 = p_ref[pl.ds(ROW_W0, WIDTH), :]
    w1 = p_ref[pl.ds(ROW_W1, WIDTH), :]
    w2 = p_ref[pl.ds(ROW_W2, WIDTH), :]
    wl = p_ref[pl.ds(ROW_WL, WIDTH), :]
    b0 = p_ref[pl.ds(ROW_B0, 1), :]
    b1 = p_ref[pl.ds(ROW_B1, 1), :]
    b2 = p_ref[pl.ds(ROW_B2, 1), :]
    bl = p_ref[pl.ds(ROW_BL, 1), :]

    x = x_ref[...]                                                     # [B, 64]
    # conv0 (same pad, K=4, s=2, C 4->8) as one dense matmul + ReLU
    h = jnp.maximum(jnp.dot(x, w0, preferred_element_type=jnp.float32) + b0, 0.0)
    # conv1 (same pad, K=4, s=2, C 8->16)
    h = jnp.maximum(jnp.dot(h, w1, preferred_element_type=jnp.float32) + b1, 0.0)
    # conv2 (VALID, K=4, s=1 -> L_out=1, C 16->16); padded columns stay exactly 0
    h = jnp.maximum(jnp.dot(h, w2, preferred_element_type=jnp.float32) + b2, 0.0)
    # logits 1x1 conv: [B,16(+pad)] @ [16(+pad), 6(+pad)] + bias
    y = jnp.dot(h, wl, preferred_element_type=jnp.float32) + bl        # [B, 64]

    out_ref[...] = y[:, :NUM_OUTPUTS].astype(out_ref.dtype)


def _fused_pallas_forward(x2d, slab):
    vmem = pl.BlockSpec(memory_space=pltpu.MemorySpace.VMEM)
    cost = pl.CostEstimate(
        flops=2 * BATCH * WIDTH * WIDTH * 4,
        transcendentals=0,
        bytes_accessed=(x2d.size + slab.size + BATCH * NUM_OUTPUTS) * 4,
    )
    return pl.pallas_call(
        _fused_forward_kernel,
        out_shape=jax.ShapeDtypeStruct((BATCH, NUM_OUTPUTS), jnp.float32),
        in_specs=[vmem, vmem],
        out_specs=vmem,
        cost_estimate=cost,
    )(x2d, slab)


# -------------------- parameter init (deterministic, xavier_uniform + zero bias) --------
def _xavier_uniform(key, shape):
    # shape = (C_out, C_in, K); fan_in = C_in*K, fan_out = C_out*K (torch convention)
    c_out, c_in, k = shape
    bound = math.sqrt(6.0 / (c_in * k + c_out * k))
    return jax.random.uniform(key, shape, jnp.float32, minval=-bound, maxval=bound)


def init_params(key):
    params = {}
    in_c = OBS_SHAPE[2]
    for i, (out_c, k, _s) in enumerate(FILTERS):
        key, sub = jax.random.split(key)
        params[f"conv{i}"] = {
            "w": _xavier_uniform(sub, (out_c, in_c, k)),
            "b": jnp.zeros((out_c,), jnp.float32),
        }
        in_c = out_c
    key, sub = jax.random.split(key)
    params["logits"] = {
        "w": _xavier_uniform(sub, (NUM_OUTPUTS, in_c, 1)),
        "b": jnp.zeros((NUM_OUTPUTS,), jnp.float32),
    }
    return params


# -------------------- host-side conv -> block-Toeplitz dense lowering (runs ONCE) -------
def _conv_to_dense(w, l_in, l_out, stride, pad_left):
    """PyTorch Conv1d weight [C_out, C_in, K] -> dense [l_in*C_in, l_out*C_out].

    Output flat layout is length-major / channel-minor on both sides; stride and
    TF-"same" zero padding are baked in as zero blocks.
    """
    c_out, c_in, k_taps = w.shape
    wt = jnp.transpose(w, (2, 1, 0))                     # [K, C_in, C_out]
    dense = jnp.zeros((l_in * c_in, l_out * c_out), jnp.float32)
    for lo in range(l_out):
        for k in range(k_taps):
            li = lo * stride - pad_left + k
            if 0 <= li < l_in:
                dense = dense.at[li * c_in:(li + 1) * c_in,
                                 lo * c_out:(lo + 1) * c_out].set(wt[k])
    return dense


def _pad_to(a, rows, cols):
    return jnp.pad(a, ((0, rows - a.shape[0]), (0, cols - a.shape[1])))


def pack_params(params):
    """Pack all weights/biases into one [SLAB_ROWS, WIDTH] f32 slab (single input DMA)."""
    w0d = _conv_to_dense(params["conv0"]["w"], L_IN0, L0_OUT, S0, P0L)     # [64, 64]
    w1d = _conv_to_dense(params["conv1"]["w"], L0_OUT, L1_OUT, S1, P1L)    # [64, 64]
    w2d = _conv_to_dense(params["conv2"]["w"], L1_OUT, L2_OUT, S2, 0)      # [64, 16]
    wld = _conv_to_dense(params["logits"]["w"], L2_OUT, L2_OUT, 1, 0)      # [16,  6]

    b0r = jnp.tile(params["conv0"]["b"], L0_OUT)                           # [64]
    b1r = jnp.tile(params["conv1"]["b"], L1_OUT)                           # [64]
    b2r = jnp.tile(params["conv2"]["b"], L2_OUT)                           # [16]
    blr = params["logits"]["b"]                                            # [6]

    slab = jnp.concatenate([
        _pad_to(w0d, WIDTH, WIDTH),
        _pad_to(w1d, WIDTH, WIDTH),
        _pad_to(w2d, WIDTH, WIDTH),
        _pad_to(wld, WIDTH, WIDTH),
        _pad_to(b0r[None, :], 1, WIDTH),
        _pad_to(b1r[None, :], 1, WIDTH),
        _pad_to(b2r[None, :], 1, WIDTH),
        _pad_to(blr[None, :], 1, WIDTH),
    ], axis=0)
    assert slab.shape == (SLAB_ROWS, WIDTH)
    return slab


# -------------------- forward pass (matches VisionNetwork1D.forward) --------------------
def vision_network_1d_forward(obs, packed_params):
    # obs: [B, 1, W, C].  Torch does permute(0,3,1,2)->[B,C,1,W] then squeeze(2)->[B,C,W];
    # the equivalent channels-last layout here is [B, W, C], flattened length-major /
    # channel-minor to [B, W*C] so the whole batch is the matmul M dimension.
    x2d = obs.astype(jnp.float32).reshape(obs.shape[0], L_IN0 * C_IN0)     # [B, 64]
    return _fused_pallas_forward(x2d, packed_params)                       # [B, num_outputs]


# -------------------- pure-JAX reference (lax.conv) for correctness check ---------------
def _ref_conv(x, w, b, s, relu):
    y = jax.lax.conv_general_dilated(
        x, jnp.transpose(w, (2, 1, 0)), window_strides=(s,), padding="VALID",
        dimension_numbers=("NWC", "WIO", "NWC"))
    y = y + b.reshape(1, 1, -1)
    return jnp.maximum(y, 0.0) if relu else y


def reference_forward(obs, params):
    x = obs.astype(jnp.float32)[:, 0, :, :]
    in_size = x.shape[1]
    for i, (_out_c, k, s) in enumerate(FILTERS[:-1]):
        (p_l, p_r), out_size = same_padding_1d(in_size, k, s)
        x = jnp.pad(x, ((0, 0), (p_l, p_r), (0, 0)))
        x = _ref_conv(x, params[f"conv{i}"]["w"], params[f"conv{i}"]["b"], s, True)
        in_size = out_size
    _out_c, k, s = FILTERS[-1]
    i = len(FILTERS) - 1
    x = _ref_conv(x, params[f"conv{i}"]["w"], params[f"conv{i}"]["b"], s, True)
    y = _ref_conv(x, params["logits"]["w"], params["logits"]["b"], 1, False)
    return y[:, 0, :]


if __name__ == "__main__":
    key = jax.random.PRNGKey(0)
    key, k_obs, k_par = jax.random.split(key, 3)
    obs = jax.random.normal(k_obs, (BATCH,) + OBS_SHAPE, dtype=jnp.float32)  # [B, 1, W, C]
    params = init_params(k_par)

    # Packed once at init; reused across all forward calls (no per-step repacking).
    packed = pack_params(params)
    jax.block_until_ready(packed)

    fwd = jax.jit(vision_network_1d_forward)
    logits = fwd(obs, packed)
    jax.block_until_ready(logits)

    ref = reference_forward(obs, params)
    assert logits.shape == (BATCH, NUM_OUTPUTS), logits.shape
    assert jnp.allclose(logits, ref, atol=1e-4, rtol=1e-4), (logits, ref)

    print("KERNEL_OK")
</pallas_src>

<mosaic_0001>
module attributes {stable_mosaic.version = 11 : i64} {
  func.func @_fused_forward_kernel(%arg0: memref<2x64xf32, #tpu.memory_space<vmem>>, %arg1: memref<260x64xf32, #tpu.memory_space<vmem>>, %arg2: memref<2x6xf32, #tpu.memory_space<vmem>>) attributes {dimension_semantics = [], scalar_prefetch = 0 : i64, scratch_operands = 0 : i64, tpu.core_type = #tpu.core_type<tc>} {
    %c0 = arith.constant 0 : index
    %c0_0 = arith.constant 0 : index
    %0 = vector.load %arg1[%c0, %c0_0] : memref<260x64xf32, #tpu.memory_space<vmem>>, vector<64x64xf32>
    %c64 = arith.constant 64 : index
    %c0_1 = arith.constant 0 : index
    %1 = vector.load %arg1[%c64, %c0_1] : memref<260x64xf32, #tpu.memory_space<vmem>>, vector<64x64xf32>
    %c128 = arith.constant 128 : index
    %c0_2 = arith.constant 0 : index
    %2 = vector.load %arg1[%c128, %c0_2] : memref<260x64xf32, #tpu.memory_space<vmem>>, vector<64x64xf32>
    %c192 = arith.constant 192 : index
    %c0_3 = arith.constant 0 : index
    %3 = vector.load %arg1[%c192, %c0_3] : memref<260x64xf32, #tpu.memory_space<vmem>>, vector<64x64xf32>
    %c256 = arith.constant 256 : index
    %c0_4 = arith.constant 0 : index
    %4 = vector.load %arg1[%c256, %c0_4] : memref<260x64xf32, #tpu.memory_space<vmem>>, vector<1x64xf32>
    %c257 = arith.constant 257 : index
    %c0_5 = arith.constant 0 : index
    %5 = vector.load %arg1[%c257, %c0_5] : memref<260x64xf32, #tpu.memory_space<vmem>>, vector<1x64xf32>
    %c258 = arith.constant 258 : index
    %c0_6 = arith.constant 0 : index
    %6 = vector.load %arg1[%c258, %c0_6] : memref<260x64xf32, #tpu.memory_space<vmem>>, vector<1x64xf32>
    %c259 = arith.constant 259 : index
    %c0_7 = arith.constant 0 : index
    %7 = vector.load %arg1[%c259, %c0_7] : memref<260x64xf32, #tpu.memory_space<vmem>>, vector<1x64xf32>
    %c0_8 = arith.constant 0 : index
    %c0_9 = arith.constant 0 : index
    %8 = vector.load %arg0[%c0_8, %c0_9] : memref<2x64xf32, #tpu.memory_space<vmem>>, vector<2x64xf32>
    %cst = arith.constant dense<0.000000e+00> : vector<2x64xf32>
    %9 = tpu.matmul %8, %0, %cst {dimension_numbers = #tpu.dot_dimension_numbers<[1], [0], [0], [1], [0, 0, 1, 1], [], []>} : vector<2x64xf32>, vector<64x64xf32>, vector<2x64xf32> -> vector<2x64xf32>
    %10 = vector.broadcast %4 : vector<1x64xf32> to vector<2x64xf32>
    %11 = arith.addf %9, %10 : vector<2x64xf32>
    %cst_10 = arith.constant 0.000000e+00 : f32
    %12 = vector.broadcast %cst_10 : f32 to vector<2x64xf32>
    %13 = arith.maximumf %11, %12 : vector<2x64xf32>
    %cst_11 = arith.constant dense<0.000000e+00> : vector<2x64xf32>
    %14 = tpu.matmul %13, %1, %cst_11 {dimension_numbers = #tpu.dot_dimension_numbers<[1], [0], [0], [1], [0, 0, 1, 1], [], []>} : vector<2x64xf32>, vector<64x64xf32>, vector<2x64xf32> -> vector<2x64xf32>
    %15 = vector.broadcast %5 : vector<1x64xf32> to vector<2x64xf32>
    %16 = arith.addf %14, %15 : vector<2x64xf32>
    %cst_12 = arith.constant 0.000000e+00 : f32
    %17 = vector.broadcast %cst_12 : f32 to vector<2x64xf32>
    %18 = arith.maximumf %16, %17 : vector<2x64xf32>
    %cst_13 = arith.constant dense<0.000000e+00> : vector<2x64xf32>
    %19 = tpu.matmul %18, %2, %cst_13 {dimension_numbers = #tpu.dot_dimension_numbers<[1], [0], [0], [1], [0, 0, 1, 1], [], []>} : vector<2x64xf32>, vector<64x64xf32>, vector<2x64xf32> -> vector<2x64xf32>
    %20 = vector.broadcast %6 : vector<1x64xf32> to vector<2x64xf32>
    %21 = arith.addf %19, %20 : vector<2x64xf32>
    %cst_14 = arith.constant 0.000000e+00 : f32
    %22 = vector.broadcast %cst_14 : f32 to vector<2x64xf32>
    %23 = arith.maximumf %21, %22 : vector<2x64xf32>
    %cst_15 = arith.constant dense<0.000000e+00> : vector<2x64xf32>
    %24 = tpu.matmul %23, %3, %cst_15 {dimension_numbers = #tpu.dot_dimension_numbers<[1], [0], [0], [1], [0, 0, 1, 1], [], []>} : vector<2x64xf32>, vector<64x64xf32>, vector<2x64xf32> -> vector<2x64xf32>
    %25 = vector.broadcast %7 : vector<1x64xf32> to vector<2x64xf32>
    %26 = arith.addf %24, %25 : vector<2x64xf32>
    %27 = vector.extract_strided_slice %26 {offsets = [0, 0], sizes = [2, 6], strides = [1, 1]} : vector<2x64xf32> to vector<2x6xf32>
    %c0_16 = arith.constant 0 : index
    %c0_17 = arith.constant 0 : index
    %28 = vector.load %arg2[%c0_16, %c0_17] : memref<2x6xf32, #tpu.memory_space<vmem>>, vector<2x6xf32>
    tpu.vector_store %arg2[%c0_16, %c0_17], %27 {strides = array<i32>} : memref<2x6xf32, #tpu.memory_space<vmem>>, vector<2x6xf32>,
    return
  }
}

</mosaic_0001>

<llo_original>
// kernel: vision_network_1d_forward.1
$region0: #{vision_network_1d_forward.1}
  #allocation0 [shape = 'u32[]', space=smem, size = 0x4, offset = 0x4, fixed_abs, tag = 'smem constant byte address 0x4 - core index']
  #allocation1 [shape = 'u32[72,128]{1,0:T(1,128)}', space=vmem, size = 0x9000, scoped, tag = 'internal scratch']
  %s0 = inlined_call_operand.vmem [shape: f32[2,64], index: 0, kind: input, shape index: {}]
  %s1 = inlined_call_operand.vmem [shape: f32[260,64], index: 1, kind: input, shape index: {}]
  %s2 = inlined_call_operand.hbm [shape: f32[2,6], index: 2, kind: output, shape index: {}]
  %s3 = sld [smem:[#allocation0]]
  $region18: #{vision_network_1d_forward.1} parent=0
    _
  %s5 = ssub.s32 1, %s3
  %s6 = scalar_select 0, %s5, %s3
  $region1: #{vision_network_1d_forward.1} parent=0
    #allocation2 [shape = 'u8[1024]{0}', space=vmem, size = 0x400, scoped, tag = 'output window, operand 0, single buffered']
    #allocation3 [shape = 's32[1]{0}', space=sflag, size = 0x4, scoped, tag = 'scoped memory for vision_network_1d_forward.1']
    %7 = vsyncpa [#allocation3], 0
    // Predicated region
    $region2: #{vision_network_1d_forward.1} parent=1 // pred_check
      _
    $region3: #{vision_network_1d_forward.1} parent=1 // pred_check_branch
      %9 = sbr.rel (0) target = $region5
    $region4: #{vision_network_1d_forward.1} parent=1 // pred_region
      _
    $region5: #{vision_network_1d_forward.1} parent=1 // pred_fallthru
      _
    // Predicated region
    $region6: #{vision_network_1d_forward.1} parent=1 // pred_check
      _
    $region7: #{vision_network_1d_forward.1} parent=1 // pred_check_branch
      %11 = sbr.rel (0) target = $region9
    $region8: #{vision_network_1d_forward.1} parent=1 // pred_region
      _
    $region9: #{vision_network_1d_forward.1} parent=1 // pred_fallthru
      _
    %v12 = vld [vmem:[%s1] sm:$0xff]
    %v13 = vld [vmem:[%s1 + $0x8] sm:$0xff]
    %v14 = vld [vmem:[%s1 + $0x10] sm:$0xff]
    %v15 = vld [vmem:[%s1 + $0x18] sm:$0xff]
    %v16 = vld [vmem:[%s1 + $0x20] sm:$0xff]
    %v17 = vld [vmem:[%s1 + $0x28] sm:$0xff]
    %v18 = vld [vmem:[%s1 + $0x30] sm:$0xff]
    %v19 = vld [vmem:[%s1 + $0x38] sm:$0xff]
    %v20 = vld [vmem:[%s1 + $0x40] sm:$0xff]
    %v21 = vld [vmem:[%s1 + $0x48] sm:$0xff]
    %v22 = vld [vmem:[%s1 + $0x50] sm:$0xff]
    %v23 = vld [vmem:[%s1 + $0x58] sm:$0xff]
    %v24 = vld [vmem:[%s1 + $0x60] sm:$0xff]
    %v25 = vld [vmem:[%s1 + $0x68] sm:$0xff]
    %v26 = vld [vmem:[%s1 + $0x70] sm:$0xff]
    %v27 = vld [vmem:[%s1 + $0x78] sm:$0xff]
    %v28 = vld [vmem:[%s1 + $0x80] sm:$0xff]
    %v29 = vld [vmem:[%s1 + $0x88] sm:$0xff]
    %v30 = vld [vmem:[%s1 + $0x90] sm:$0xff]
    %v31 = vld [vmem:[%s1 + $0x98] sm:$0xff]
    %v32 = vld [vmem:[%s1 + $0xa0] sm:$0xff]
    %v33 = vld [vmem:[%s1 + $0xa8] sm:$0xff]
    %v34 = vld [vmem:[%s1 + $0xb0] sm:$0xff]
    %v35 = vld [vmem:[%s1 + $0xb8] sm:$0xff]
    %v36 = vld [vmem:[%s1 + $0xc0] sm:$0xff]
    %v37 = vld [vmem:[%s1 + $0xc8] sm:$0xff]
    %v38 = vld [vmem:[%s1 + $0xd0] sm:$0xff]
    %v39 = vld [vmem:[%s1 + $0xd8] sm:$0xff]
    %v40 = vld [vmem:[%s1 + $0xe0] sm:$0xff]
    %v41 = vld [vmem:[%s1 + $0xe8] sm:$0xff]
    %v42 = vld [vmem:[%s1 + $0xf0] sm:$0xff]
    %v43 = vld [vmem:[%s1 + $0xf8] sm:$0xff]
    %v44 = vld [vmem:[%s1 + $0x100] sm:$0x1]
    %v45 = vld [vmem:[%s1 + $0x101] sm:$0x1]
    %v46 = vld [vmem:[%s1 + $0x102] sm:$0x1]
    %v47 = vld [vmem:[%s1 + $0x103] sm:$0x1]
    %v48 = vld [vmem:[%s0] sm:$0x3]
    %v49 = vperm.slane %v44, 0
    %vm50 = vcmask 523264
    %v52 = vsel %vm50, %v48, 0
    %54 = vmatpush.msra.mxu0 0.0
    %55 = vmatpush.msra.mxu0 0.0
    %56 = vmatpush.msra.mxu0 0.0
    %57 = vmatpush.msra.mxu0 0.0
    %58 = vmatpush.msra.mxu0 0.0
    %59 = vmatpush.msra.mxu0 0.0
    %60 = vmatpush.msra.mxu0 0.0
    %61 = vmatpush.msra.mxu0 0.0
    %62 = vmatpush.msra.mxu0 %v19
    %63 = vmatpush.msra.mxu0 %v18
    %64 = vmatpush.msra.mxu0 %v17
    %65 = vmatpush.msra.mxu0 %v16
    %66 = vmatpush.msra.mxu0 %v15
    %67 = vmatpush.msra.mxu0 %v14
    %68 = vmatpush.msra.mxu0 %v13
    %69 = vmatpush.msra.mxu0 %v12
    %70 = vmatmul.f32.gmra.mxu0 %v52
    %v71 = vpop.f32.mrf.mxu0
    %v72 = vadd.f32 %v49, %v71
    %73 = vdwg.mxu0
    %v74 = vmax.f32 %v72, 0.0
    %v75 = vperm.slane %v45, 0
    %v77 = vsel %vm50, %v74, 0
    %79 = vmatpush.msra.mxu0 0.0
    %80 = vmatpush.msra.mxu0 0.0
    %81 = vmatpush.msra.mxu0 0.0
    %82 = vmatpush.msra.mxu0 0.0
    %83 = vmatpush.msra.mxu0 0.0
    %84 = vmatpush.msra.mxu0 0.0
    %85 = vmatpush.msra.mxu0 0.0
    %86 = vmatpush.msra.mxu0 0.0
    %87 = vmatpush.msra.mxu0 %v27
    %88 = vmatpush.msra.mxu0 %v26
    %89 = vmatpush.msra.mxu0 %v25
    %90 = vmatpush.msra.mxu0 %v24
    %91 = vmatpush.msra.mxu0 %v23
    %92 = vmatpush.msra.mxu0 %v22
    %93 = vmatpush.msra.mxu0 %v21
    %94 = vmatpush.msra.mxu0 %v20
    %95 = vmatmul.f32.gmra.mxu0 %v77
    %v96 = vpop.f32.mrf.mxu0
    %v97 = vadd.f32 %v75, %v96
    %98 = vdwg.mxu0
    %v99 = vmax.f32 %v97, 0.0
    %v100 = vperm.slane %v46, 0
    %v102 = vsel %vm50, %v99, 0
    %104 = vmatpush.msra.mxu0 0.0
    %105 = vmatpush.msra.mxu0 0.0
    %106 = vmatpush.msra.mxu0 0.0
    %107 = vmatpush.msra.mxu0 0.0
    %108 = vmatpush.msra.mxu0 0.0
    %109 = vmatpush.msra.mxu0 0.0
    %110 = vmatpush.msra.mxu0 0.0
    %111 = vmatpush.msra.mxu0 0.0
    %112 = vmatpush.msra.mxu0 %v35
    %113 = vmatpush.msra.mxu0 %v34
    %114 = vmatpush.msra.mxu0 %v33
    %115 = vmatpush.msra.mxu0 %v32
    %116 = vmatpush.msra.mxu0 %v31
    %117 = vmatpush.msra.mxu0 %v30
    %118 = vmatpush.msra.mxu0 %v29
    %119 = vmatpush.msra.mxu0 %v28
    %120 = vmatmul.f32.gmra.mxu0 %v102
    %v121 = vpop.f32.mrf.mxu0
    %v122 = vadd.f32 %v100, %v121
    %123 = vdwg.mxu0
    %v124 = vmax.f32 %v122, 0.0
    %v125 = vperm.slane %v47, 0
    %v127 = vsel %vm50, %v124, 0
    %129 = vmatpush.msra.mxu0 0.0
    %130 = vmatpush.msra.mxu0 0.0
    %131 = vmatpush.msra.mxu0 0.0
    %132 = vmatpush.msra.mxu0 0.0
    %133 = vmatpush.msra.mxu0 0.0
    %134 = vmatpush.msra.mxu0 0.0
    %135 = vmatpush.msra.mxu0 0.0
    %136 = vmatpush.msra.mxu0 0.0
    %137 = vmatpush.msra.mxu0 %v43
    %138 = vmatpush.msra.mxu0 %v42
    %139 = vmatpush.msra.mxu0 %v41
    %140 = vmatpush.msra.mxu0 %v40
    %141 = vmatpush.msra.mxu0 %v39
    %142 = vmatpush.msra.mxu0 %v38
    %143 = vmatpush.msra.mxu0 %v37
    %144 = vmatpush.msra.mxu0 %v36
    %145 = vmatmul.f32.gmra.mxu0 %v127
    %v146 = vpop.f32.mrf.mxu0
    %v147 = vadd.f32 %v125, %v146
    %148 = vdwg.mxu0
    %vm149 = vcmask 41984
    %150 = vst.msk [vmem:[#allocation2] sm:$0x3] %vm149, %v147
    // Predicated region
    $region10: #{vision_network_1d_forward.1} parent=1 // pred_check
      _
    $region11: #{vision_network_1d_forward.1} parent=1 // pred_check_branch
      %152 = sbr.rel (0) target = $region13
    $region12: #{vision_network_1d_forward.1} parent=1 // pred_region
      %154 = vsyncadd [#allocation3], 0
      %s156 = sshll.u32 [#allocation2], 4
      %s157 = int_to_ptr.vmem [resolvable:$true] %s156
      %s158 = sshll.u32 %s2, 4
      %s159 = int_to_ptr.hbm [resolvable:$true] %s158
      %161 = dma.vmem_to_hbm [thread:$0]  %s157, 32, %s159, [#allocation3]
    $region13: #{vision_network_1d_forward.1} parent=1 // pred_fallthru
      _
    // Predicated region
    $region14: #{vision_network_1d_forward.1} parent=1 // pred_check
      _
    $region15: #{vision_network_1d_forward.1} parent=1 // pred_check_branch
      %163 = sbr.rel (0) target = $region17
    $region16: #{vision_network_1d_forward.1} parent=1 // pred_region
      %165 = dma.done [#allocation3], 32
    $region17: #{vision_network_1d_forward.1} parent=1 // pred_fallthru
      _
    %166 = vsyncpa [#allocation3], 1

</llo_original>
